<compile_context>
chip_gen: v7x
topology: tpu7x:2x2x1
jax: 0.10.0
libtpu: 0.0.40
codegen_flags: <defaults>
</compile_context>

<pallas_src>
import functools

import jax
import jax.numpy as jnp
from jax.experimental import pallas as pl
from jax.experimental.pallas import tpu as pltpu

_LANE = 128
_SUBLANE = 8


def _round_up(x, m):
    return (x + m - 1) // m * m


def _vmem_capacity_bytes():
    """Physical VMEM per TensorCore (generation-aware), with a safe fallback."""
    try:
        return int(pltpu.get_tpu_info().vmem_capacity_bytes)
    except Exception:                       # info query is best-effort
        return 64 * 1024 * 1024             # conservative: v7x per-TC size


def _sepconv_kernel(x_ref, wdw_ref, wpw_ref, o_ref, *, cr):
    # x_ref  : (1, Hp, Wp, Cp)    whole (padded) image, resident per batch elem
    # wdw_ref: (KH, KW, Cp)       depthwise weights, channels on lanes
    # wpw_ref: (Cp, Cop)          pointwise (1x1) weights
    # o_ref  : (1, TH, Wo, Cop)   one output row tile (TH is a multiple of cr)
    KH, KW, Cp = wdw_ref.shape
    _, TH, Wo, Cop = o_ref.shape

    r = pl.program_id(1)
    row0 = pl.multiple_of(r * TH, TH)          # first output row of this tile

    # bf16 inputs: run the depthwise taps in bf16 (2x vreg density on v6e/v7x)
    # and feed bf16 operands to the MXU (full MXU rate); accumulation stays
    # fp32 in both stages.  f32 inputs keep an exact all-f32 path (v5e has no
    # bf16 VALU anyway).
    use_bf16 = x_ref.dtype == jnp.bfloat16
    tap_dtype = jnp.bfloat16 if use_bf16 else jnp.float32
    mxu_dtype = jnp.bfloat16 if use_bf16 else jnp.float32

    # Hoist weight loads/casts out of the chunk loop (broadcasts aren't CSE'd).
    wdw = wdw_ref[...].astype(tap_dtype)       # (KH, KW, Cp)
    wpw = wpw_ref[...].astype(mxu_dtype)       # (Cp, Cop)

    n_chunks = TH // cr                        # static

    @pl.loop(0, n_chunks)                      # rolled: bounds live ranges
    def _(c):
        src_r0 = pl.multiple_of(row0 + c * cr, cr)     # first input row
        dst_r0 = pl.multiple_of(c * cr, cr)            # row inside the tile

        # Input rows needed by this chunk (KH-1 halo rows).
        x_win = x_ref[0, pl.ds(src_r0, cr + KH - 1), :, :].astype(tap_dtype)

        # Depthwise KHxKW: the W-direction (sublane) shift is hoisted out of
        # the kh loop (one unaligned slice per kw, not per tap).  Products in
        # tap_dtype, accumulation in fp32.
        acc = jnp.zeros((cr, Wo, Cp), jnp.float32)
        for kw in range(KW):
            x_kw = x_win[:, kw:kw + Wo, :]             # (cr+KH-1, Wo, Cp)
            for kh in range(KH):
                acc = acc + (x_kw[kh:kh + cr, :, :] * wdw[kh, kw, :]).astype(
                    jnp.float32)

        # Pointwise 1x1 conv == one (cr*Wo, Cp) x (Cp, Cop) MXU matmul.  Wo is
        # a multiple of 8, so the fold and the store are layout-trivial/dense.
        out = jnp.dot(acc.reshape(cr * Wo, Cp).astype(mxu_dtype), wpw,
                      preferred_element_type=jnp.float32)
        o_ref[0, pl.ds(dst_r0, cr), :, :] = out.reshape(cr, Wo, Cop).astype(
            o_ref.dtype)


def separable_conv2d_nhwc(x_nhwc, wdw_khwc, wpw_cc, *, row_tile=None):
    """Fused depthwise(KHxKW, VALID, stride 1) + pointwise(1x1) conv in NHWC.

    x_nhwc: (N, H, W, Cin)   wdw_khwc: (KH, KW, Cin)   wpw_cc: (Cin, Cout)
    returns (N, Ho, Wo, Cout) with Ho = H-KH+1, Wo = W-KW+1.
    """
    N, H, W, Cin = x_nhwc.shape
    KH, KW, _ = wdw_khwc.shape
    Cout = wpw_cc.shape[1]
    Ho, Wo = H - KH + 1, W - KW + 1

    dtype = x_nhwc.dtype
    itemsize = jnp.dtype(dtype).itemsize

    # ---- lane/sublane-dense padding -------------------------------------
    # TODO(synk): for thin-channel layers (Cin << 128) a W-on-lanes layout
    # would avoid multiplying mostly-zero lanes; not implemented here.
    Cp = _round_up(Cin, _LANE)
    Cop = _round_up(Cout, _LANE)
    Wo_p = _round_up(Wo, _SUBLANE)             # unmasked full-width stores
    Wp = Wo_p + KW - 1

    # ---- generation-aware VMEM budget & tile planning --------------------
    vmem_cap = _vmem_capacity_bytes()
    vmem_limit = min(max((vmem_cap * 3) // 4, 32 << 20),
                     vmem_cap - (4 << 20), 100 << 20)

    # Inner chunk rows: keep the live fp32 accumulator within ~96 KiB of the
    # 256 KiB vreg file so the compiler never spills it to VMEM.
    acc_row_bytes = Wo_p * Cp * 4
    cr = int(max(1, min(_SUBLANE, (96 * 1024) // acc_row_bytes)))

    # Grid row tile: as large as the VMEM budget allows (amortizes the
    # ~0.35us/grid-step overhead and the halo re-read), a multiple of cr, and
    # with NO divisor constraint on Ho: Ho is padded up to a multiple of TH
    # instead of collapsing TH to 1 for awkward sizes.
    w_bytes = 2 * (KH * KW * Cp + Cp * Cop) * itemsize
    img_bytes = 2 * (Ho + KH - 1 + _SUBLANE) * Wp * Cp * itemsize  # dbl-buffered
    out_row_bytes = 2 * Wo_p * Cop * itemsize                      # dbl-buffered
    margin = 4 << 20                                 # in-kernel live values
    out_budget = vmem_limit - img_bytes - w_bytes - margin
    # TODO(synk): if img_bytes alone exceeds the budget (very large H*W on
    # v7x's 64 MiB VMEM), switch the image input to memory_space=pl.ANY and
    # manually double-buffer (TH+KH-1)-row halo windows via make_async_copy.
    th_cap = max(cr, (max(out_budget, out_row_bytes) // out_row_bytes) // cr * cr)
    if row_tile is not None:
        th = min(_round_up(int(row_tile), cr), _round_up(Ho, cr))
    else:
        th = min(_round_up(Ho, cr), th_cap)
    th = int(max(cr, th))

    Ho_p = _round_up(Ho, th)
    Hp = Ho_p + KH - 1

    # ---- pad operands (padded lanes/rows are zero; sliced off at the end) --
    x_p = x_nhwc
    if (Hp, Wp, Cp) != (H, W, Cin):
        x_p = jnp.pad(x_nhwc, ((0, 0), (0, Hp - H), (0, Wp - W), (0, Cp - Cin)))
    wdw_p = wdw_khwc if Cp == Cin else jnp.pad(wdw_khwc,
                                               ((0, 0), (0, 0), (0, Cp - Cin)))
    wpw_p = wpw_cc
    if (Cp, Cop) != (Cin, Cout):
        wpw_p = jnp.pad(wpw_cc, ((0, Cp - Cin), (0, Cop - Cout)))

    grid = (N, Ho_p // th)

    # Advisory cost on the true (unpadded) problem size.
    cost = pl.CostEstimate(
        flops=2 * N * Ho * Wo * Cin * (KH * KW + Cout),
        transcendentals=0,
        bytes_accessed=(N * H * W * Cin + N * Ho * Wo * Cout
                        + KH * KW * Cin + Cin * Cout) * itemsize,
    )

    # Shard megacore over the batch axis when possible so each TensorCore DMAs
    # and keeps its own image exactly once; with a single image let it split
    # the row tiles instead.
    dim_sem = ("parallel", "arbitrary") if N >= 2 else ("parallel", "parallel")

    out = pl.pallas_call(
        functools.partial(_sepconv_kernel, cr=cr),
        out_shape=jax.ShapeDtypeStruct((N, Ho_p, Wo_p, Cop), dtype),
        grid_spec=pltpu.PrefetchScalarGridSpec(
            num_scalar_prefetch=0,
            grid=grid,
            in_specs=[
                # Whole image resident per batch element, re-used across r.
                pl.BlockSpec((1, Hp, Wp, Cp), lambda n, r: (n, 0, 0, 0)),
                pl.BlockSpec((KH, KW, Cp), lambda n, r: (0, 0, 0)),
                pl.BlockSpec((Cp, Cop), lambda n, r: (0, 0)),
            ],
            out_specs=pl.BlockSpec((1, th, Wo_p, Cop),
                                   lambda n, r: (n, r, 0, 0)),
        ),
        compiler_params=pltpu.CompilerParams(
            dimension_semantics=dim_sem,
            vmem_limit_bytes=int(vmem_limit),
        ),
        cost_estimate=cost,
    )(x_p, wdw_p, wpw_p)

    return out[:, :Ho, :Wo, :Cout]


def separable_conv2d(x_nchw, w_dw, w_pw, *, row_tile=None):
    """PyTorch-layout wrapper. x:(N,Cin,H,W); w_dw:(Cin,1,KH,KW); w_pw:(Cout,Cin,1,1)."""
    # NCHW -> NHWC glue.  For an NHWC end-to-end model call
    # separable_conv2d_nhwc directly and skip these HBM round trips.
    x_nhwc = jnp.transpose(x_nchw, (0, 2, 3, 1))
    wdw = jnp.transpose(w_dw[:, 0, :, :], (1, 2, 0))          # (KH, KW, Cin)
    wpw = jnp.transpose(w_pw[:, :, 0, 0], (1, 0))             # (Cin, Cout)
    out_nhwc = separable_conv2d_nhwc(x_nhwc, wdw, wpw, row_tile=row_tile)
    return jnp.transpose(out_nhwc, (0, 3, 1, 2))              # back to NCHW


def _reference(x_nchw, w_dw, w_pw):
    """Pure-JAX reference (lax convs) matching torch Conv2d semantics."""
    Cin = x_nchw.shape[1]
    dn = ("NCHW", "OIHW", "NCHW")
    y = jax.lax.conv_general_dilated(
        x_nchw, w_dw, window_strides=(1, 1), padding="VALID",
        feature_group_count=Cin, dimension_numbers=dn)
    y = jax.lax.conv_general_dilated(
        y, w_pw, window_strides=(1, 1), padding="VALID",
        dimension_numbers=dn)
    return y


if __name__ == "__main__":
    inplanes, planes, ksize = 4, 8, 3
    N, H, W = 2, 16, 16

    key = jax.random.PRNGKey(0)
    kx, kdw, kpw = jax.random.split(key, 3)
    x = jax.random.normal(kx, (N, inplanes, H, W), dtype=jnp.float32)
    # Deterministic synthetic weights matching nn.Conv2d parameter shapes.
    w_dw = 0.1 * jax.random.normal(kdw, (inplanes, 1, ksize, ksize), dtype=jnp.float32)
    w_pw = 0.1 * jax.random.normal(kpw, (planes, inplanes, 1, 1), dtype=jnp.float32)

    ref = _reference(x, w_dw, w_pw)

    # Auto-picked tile (single row tile, two inner chunks at this size).
    out_auto = jax.block_until_ready(separable_conv2d(x, w_dw, w_pw))
    # Forced multi-tile path (exercises r>0 halo slicing + Ho padding).
    out_tiled = jax.block_until_ready(separable_conv2d(x, w_dw, w_pw, row_tile=8))

    assert out_auto.shape == ref.shape == (N, planes, H - ksize + 1, W - ksize + 1)
    assert jnp.allclose(out_auto, ref, atol=1e-4, rtol=1e-4), \
        float(jnp.max(jnp.abs(out_auto - ref)))
    assert jnp.allclose(out_tiled, ref, atol=1e-4, rtol=1e-4), \
        float(jnp.max(jnp.abs(out_tiled - ref)))

    # bf16 path: bf16 VPU taps + bf16 MXU operands, fp32 accumulation.
    out_bf16 = jax.block_until_ready(
        separable_conv2d(x.astype(jnp.bfloat16),
                         w_dw.astype(jnp.bfloat16),
                         w_pw.astype(jnp.bfloat16)))
    assert jnp.allclose(out_bf16.astype(jnp.float32), ref, atol=5e-2, rtol=5e-2), \
        float(jnp.max(jnp.abs(out_bf16.astype(jnp.float32) - ref)))

    print("KERNEL_OK")
</pallas_src>

<mosaic_0001>
module attributes {stable_mosaic.version = 11 : i64} {
  func.func @_sepconv_kernel(%arg0: i32, %arg1: i32, %arg2: memref<1x18x18x128xf32, #tpu.memory_space<vmem>>, %arg3: memref<3x3x128xf32, #tpu.memory_space<vmem>>, %arg4: memref<128x128xf32, #tpu.memory_space<vmem>>, %arg5: memref<1x16x16x128xf32, #tpu.memory_space<vmem>>) attributes {dimension_semantics = [#tpu.dimension_semantics<parallel>, #tpu.dimension_semantics<arbitrary>], iteration_bounds = array<i64: 2, 1>, scalar_prefetch = 0 : i64, scratch_operands = 0 : i64, tpu.core_type = #tpu.core_type<tc>, window_params = [{transform_indices = @transform_0, window_bounds = array<i64: 1, 18, 18, 128>}, {pipeline_mode = #tpu.pipeline_mode<synchronous>, transform_indices = @transform_1, window_bounds = array<i64: 3, 3, 128>}, {pipeline_mode = #tpu.pipeline_mode<synchronous>, transform_indices = @transform_2, window_bounds = array<i64: 128, 128>}, {transform_indices = @transform_3, window_bounds = array<i64: 1, 16, 16, 128>}]} {
    %c16_i32 = arith.constant 16 : i32
    %0 = arith.muli %arg1, %c16_i32 : i32
    %1 = tpu.assume_multiple %0, 16 : i32
    %c0 = arith.constant 0 : index
    %c0_0 = arith.constant 0 : index
    %c0_1 = arith.constant 0 : index
    %2 = vector.load %arg3[%c0, %c0_0, %c0_1] : memref<3x3x128xf32, #tpu.memory_space<vmem>>, vector<3x3x128xf32>
    %c0_2 = arith.constant 0 : index
    %c0_3 = arith.constant 0 : index
    %3 = vector.load %arg4[%c0_2, %c0_3] : memref<128x128xf32, #tpu.memory_space<vmem>>, vector<128x128xf32>
    %c0_i32 = arith.constant 0 : i32
    %c2_i32 = arith.constant 2 : i32
    %4 = arith.addi %c0_i32, %c2_i32 : i32
    %c1_i32 = arith.constant 1 : i32
    scf.for %arg6 = %c0_i32 to %4 step %c1_i32  : i32 {
      %c1_i32_5 = arith.constant 1 : i32
      %5 = arith.muli %arg6, %c1_i32_5 : i32
      %c0_i32_6 = arith.constant 0 : i32
      %6 = arith.addi %c0_i32_6, %5 : i32
      %c8_i32 = arith.constant 8 : i32
      %7 = arith.muli %6, %c8_i32 : i32
      %8 = arith.addi %1, %7 : i32
      %9 = tpu.assume_multiple %8, 8 : i32
      %c8_i32_7 = arith.constant 8 : i32
      %10 = arith.muli %6, %c8_i32_7 : i32
      %11 = tpu.assume_multiple %10, 8 : i32
      %c0_8 = arith.constant 0 : index
      %12 = arith.index_cast %9 : i32 to index
      %c0_9 = arith.constant 0 : index
      %c0_10 = arith.constant 0 : index
      %13 = vector.load %arg2[%c0_8, %12, %c0_9, %c0_10] : memref<1x18x18x128xf32, #tpu.memory_space<vmem>>, vector<1x10x18x128xf32>
      %14 = vector.shape_cast %13 : vector<1x10x18x128xf32> to vector<10x18x128xf32>
      %cst = arith.constant 0.000000e+00 : f32
      %15 = vector.broadcast %cst : f32 to vector<8x16x128xf32>
      %16 = vector.extract_strided_slice %14 {offsets = [0, 0, 0], sizes = [10, 16, 128], strides = [1, 1, 1]} : vector<10x18x128xf32> to vector<10x16x128xf32>
      %17 = vector.extract_strided_slice %16 {offsets = [0, 0, 0], sizes = [8, 16, 128], strides = [1, 1, 1]} : vector<10x16x128xf32> to vector<8x16x128xf32>
      %18 = vector.extract_strided_slice %2 {offsets = [0, 0, 0], sizes = [1, 1, 128], strides = [1, 1, 1]} : vector<3x3x128xf32> to vector<1x1x128xf32>
      %19 = vector.shape_cast %18 : vector<1x1x128xf32> to vector<128xf32>
      %20 = vector.shape_cast %19 : vector<128xf32> to vector<1x1x128xf32>
      %21 = vector.broadcast %20 : vector<1x1x128xf32> to vector<8x16x128xf32>
      %22 = arith.mulf %17, %21 : vector<8x16x128xf32>
      %23 = arith.addf %15, %22 : vector<8x16x128xf32>
      %24 = vector.extract_strided_slice %16 {offsets = [1, 0, 0], sizes = [8, 16, 128], strides = [1, 1, 1]} : vector<10x16x128xf32> to vector<8x16x128xf32>
      %25 = vector.extract_strided_slice %2 {offsets = [1, 0, 0], sizes = [1, 1, 128], strides = [1, 1, 1]} : vector<3x3x128xf32> to vector<1x1x128xf32>
      %26 = vector.shape_cast %25 : vector<1x1x128xf32> to vector<128xf32>
      %27 = vector.shape_cast %26 : vector<128xf32> to vector<1x1x128xf32>
      %28 = vector.broadcast %27 : vector<1x1x128xf32> to vector<8x16x128xf32>
      %29 = arith.mulf %24, %28 : vector<8x16x128xf32>
      %30 = arith.addf %23, %29 : vector<8x16x128xf32>
      %31 = vector.extract_strided_slice %16 {offsets = [2, 0, 0], sizes = [8, 16, 128], strides = [1, 1, 1]} : vector<10x16x128xf32> to vector<8x16x128xf32>
      %32 = vector.extract_strided_slice %2 {offsets = [2, 0, 0], sizes = [1, 1, 128], strides = [1, 1, 1]} : vector<3x3x128xf32> to vector<1x1x128xf32>
      %33 = vector.shape_cast %32 : vector<1x1x128xf32> to vector<128xf32>
      %34 = vector.shape_cast %33 : vector<128xf32> to vector<1x1x128xf32>
      %35 = vector.broadcast %34 : vector<1x1x128xf32> to vector<8x16x128xf32>
      %36 = arith.mulf %31, %35 : vector<8x16x128xf32>
      %37 = arith.addf %30, %36 : vector<8x16x128xf32>
      %38 = vector.extract_strided_slice %14 {offsets = [0, 1, 0], sizes = [10, 16, 128], strides = [1, 1, 1]} : vector<10x18x128xf32> to vector<10x16x128xf32>
      %39 = vector.extract_strided_slice %38 {offsets = [0, 0, 0], sizes = [8, 16, 128], strides = [1, 1, 1]} : vector<10x16x128xf32> to vector<8x16x128xf32>
      %40 = vector.extract_strided_slice %2 {offsets = [0, 1, 0], sizes = [1, 1, 128], strides = [1, 1, 1]} : vector<3x3x128xf32> to vector<1x1x128xf32>
      %41 = vector.shape_cast %40 : vector<1x1x128xf32> to vector<128xf32>
      %42 = vector.shape_cast %41 : vector<128xf32> to vector<1x1x128xf32>
      %43 = vector.broadcast %42 : vector<1x1x128xf32> to vector<8x16x128xf32>
      %44 = arith.mulf %39, %43 : vector<8x16x128xf32>
      %45 = arith.addf %37, %44 : vector<8x16x128xf32>
      %46 = vector.extract_strided_slice %38 {offsets = [1, 0, 0], sizes = [8, 16, 128], strides = [1, 1, 1]} : vector<10x16x128xf32> to vector<8x16x128xf32>
      %47 = vector.extract_strided_slice %2 {offsets = [1, 1, 0], sizes = [1, 1, 128], strides = [1, 1, 1]} : vector<3x3x128xf32> to vector<1x1x128xf32>
      %48 = vector.shape_cast %47 : vector<1x1x128xf32> to vector<128xf32>
      %49 = vector.shape_cast %48 : vector<128xf32> to vector<1x1x128xf32>
      %50 = vector.broadcast %49 : vector<1x1x128xf32> to vector<8x16x128xf32>
      %51 = arith.mulf %46, %50 : vector<8x16x128xf32>
      %52 = arith.addf %45, %51 : vector<8x16x128xf32>
      %53 = vector.extract_strided_slice %38 {offsets = [2, 0, 0], sizes = [8, 16, 128], strides = [1, 1, 1]} : vector<10x16x128xf32> to vector<8x16x128xf32>
      %54 = vector.extract_strided_slice %2 {offsets = [2, 1, 0], sizes = [1, 1, 128], strides = [1, 1, 1]} : vector<3x3x128xf32> to vector<1x1x128xf32>
      %55 = vector.shape_cast %54 : vector<1x1x128xf32> to vector<128xf32>
      %56 = vector.shape_cast %55 : vector<128xf32> to vector<1x1x128xf32>
      %57 = vector.broadcast %56 : vector<1x1x128xf32> to vector<8x16x128xf32>
      %58 = arith.mulf %53, %57 : vector<8x16x128xf32>
      %59 = arith.addf %52, %58 : vector<8x16x128xf32>
      %60 = vector.extract_strided_slice %14 {offsets = [0, 2, 0], sizes = [10, 16, 128], strides = [1, 1, 1]} : vector<10x18x128xf32> to vector<10x16x128xf32>
      %61 = vector.extract_strided_slice %60 {offsets = [0, 0, 0], sizes = [8, 16, 128], strides = [1, 1, 1]} : vector<10x16x128xf32> to vector<8x16x128xf32>
      %62 = vector.extract_strided_slice %2 {offsets = [0, 2, 0], sizes = [1, 1, 128], strides = [1, 1, 1]} : vector<3x3x128xf32> to vector<1x1x128xf32>
      %63 = vector.shape_cast %62 : vector<1x1x128xf32> to vector<128xf32>
      %64 = vector.shape_cast %63 : vector<128xf32> to vector<1x1x128xf32>
      %65 = vector.broadcast %64 : vector<1x1x128xf32> to vector<8x16x128xf32>
      %66 = arith.mulf %61, %65 : vector<8x16x128xf32>
      %67 = arith.addf %59, %66 : vector<8x16x128xf32>
      %68 = vector.extract_strided_slice %60 {offsets = [1, 0, 0], sizes = [8, 16, 128], strides = [1, 1, 1]} : vector<10x16x128xf32> to vector<8x16x128xf32>
      %69 = vector.extract_strided_slice %2 {offsets = [1, 2, 0], sizes = [1, 1, 128], strides = [1, 1, 1]} : vector<3x3x128xf32> to vector<1x1x128xf32>
      %70 = vector.shape_cast %69 : vector<1x1x128xf32> to vector<128xf32>
      %71 = vector.shape_cast %70 : vector<128xf32> to vector<1x1x128xf32>
      %72 = vector.broadcast %71 : vector<1x1x128xf32> to vector<8x16x128xf32>
      %73 = arith.mulf %68, %72 : vector<8x16x128xf32>
      %74 = arith.addf %67, %73 : vector<8x16x128xf32>
      %75 = vector.extract_strided_slice %60 {offsets = [2, 0, 0], sizes = [8, 16, 128], strides = [1, 1, 1]} : vector<10x16x128xf32> to vector<8x16x128xf32>
      %76 = vector.extract_strided_slice %2 {offsets = [2, 2, 0], sizes = [1, 1, 128], strides = [1, 1, 1]} : vector<3x3x128xf32> to vector<1x1x128xf32>
      %77 = vector.shape_cast %76 : vector<1x1x128xf32> to vector<128xf32>
      %78 = vector.shape_cast %77 : vector<128xf32> to vector<1x1x128xf32>
      %79 = vector.broadcast %78 : vector<1x1x128xf32> to vector<8x16x128xf32>
      %80 = arith.mulf %75, %79 : vector<8x16x128xf32>
      %81 = arith.addf %74, %80 : vector<8x16x128xf32>
      %82 = vector.shape_cast %81 : vector<8x16x128xf32> to vector<128x128xf32>
      %cst_11 = arith.constant dense<0.000000e+00> : vector<128x128xf32>
      %83 = tpu.matmul %82, %3, %cst_11 {dimension_numbers = #tpu.dot_dimension_numbers<[1], [0], [0], [1], [0, 0, 1, 1], [], []>} : vector<128x128xf32>, vector<128x128xf32>, vector<128x128xf32> -> vector<128x128xf32>
      %84 = vector.shape_cast %83 : vector<128x128xf32> to vector<8x16x128xf32>
      %c0_12 = arith.constant 0 : index
      %85 = arith.index_cast %11 : i32 to index
      %c0_13 = arith.constant 0 : index
      %c0_14 = arith.constant 0 : index
      %86 = vector.load %arg5[%c0_12, %85, %c0_13, %c0_14] : memref<1x16x16x128xf32, #tpu.memory_space<vmem>>, vector<1x8x16x128xf32>
      %87 = vector.shape_cast %86 : vector<1x8x16x128xf32> to vector<8x16x128xf32>
      %88 = vector.shape_cast %84 : vector<8x16x128xf32> to vector<1x8x16x128xf32>
      tpu.vector_store %arg5[%c0_12, %85, %c0_13, %c0_14], %88 {strides = array<i32>} : memref<1x16x16x128xf32, #tpu.memory_space<vmem>>, vector<1x8x16x128xf32>,
    }
    %c2_i32_4 = arith.constant 2 : i32
    return
  }
  func.func @transform_0(%arg0: i32, %arg1: i32) -> (i32, i32, i32, i32) {
    %c0_i32 = arith.constant 0 : i32
    %c0_i32_0 = arith.constant 0 : i32
    %c0_i32_1 = arith.constant 0 : i32
    %c0_i32_2 = arith.constant 0 : i32
    return %arg0, %c0_i32, %c0_i32_0, %c0_i32_1 : i32, i32, i32, i32
  }
  func.func @transform_1(%arg0: i32, %arg1: i32) -> (i32, i32, i32) {
    %c0_i32 = arith.constant 0 : i32
    %c0_i32_0 = arith.constant 0 : i32
    %c0_i32_1 = arith.constant 0 : i32
    %c0_i32_2 = arith.constant 0 : i32
    return %c0_i32, %c0_i32_0, %c0_i32_1 : i32, i32, i32
  }
  func.func @transform_2(%arg0: i32, %arg1: i32) -> (i32, i32) {
    %c0_i32 = arith.constant 0 : i32
    %c0_i32_0 = arith.constant 0 : i32
    %c0_i32_1 = arith.constant 0 : i32
    return %c0_i32, %c0_i32_0 : i32, i32
  }
  func.func @transform_3(%arg0: i32, %arg1: i32) -> (i32, i32, i32, i32) {
    %c0_i32 = arith.constant 0 : i32
    %c0_i32_0 = arith.constant 0 : i32
    %c0_i32_1 = arith.constant 0 : i32
    return %arg0, %arg1, %c0_i32, %c0_i32_0 : i32, i32, i32, i32
  }
}

</mosaic_0001>

<llo_original>
// kernel: tpu_custom_call.1
$region0: #{tpu_custom_call.1}
  #allocation0 [shape = 'u32[]', space=smem, size = 0x4, offset = 0x4, fixed_abs, tag = 'smem constant byte address 0x4 - core index']
  #allocation1 [shape = 'u32[144,128]{1,0:T(1,128)}', space=vmem, size = 0x12000, scoped, tag = 'internal scratch']
  %s0 = inlined_call_operand.vmem [shape: f32[2,18,18,128], index: 0, kind: input, shape index: {}]
  %s1 = inlined_call_operand.vmem [shape: f32[3,3,128], index: 1, kind: input, shape index: {}]
  %s2 = inlined_call_operand.vmem [shape: f32[128,128], index: 2, kind: input, shape index: {}]
  %s3 = inlined_call_operand.hbm [shape: f32[2,16,16,128], index: 3, kind: output, shape index: {}]
  %s4 = sld [smem:[#allocation0]]
  $region52: #{tpu_custom_call.1} parent=0
    _
  %s6 = ssub.s32 1, %s4
  %s7 = scalar_select 0, %s6, %s4
  $region1: #{tpu_custom_call.1} parent=0
    #allocation2 [shape = 'u8[262144]{0}', space=vmem, size = 0x40000, scoped, tag = 'output window, operand 0']
    #allocation3 [shape = 's32[2]{0}', space=sflag, size = 0x8, scoped, tag = 'scoped memory for tpu_custom_call.1']
    %8 = vsyncpa [#allocation3], 0
    %s9 = scalar_lea.sflag [#allocation3], 1
    %10 = vsyncpa %s9, 0
    loop: start=0, step=1, limit=4
    $region2: #{tpu_custom_call.1} parent=1 // loop_pre_header
      _
    $region3: #{tpu_custom_call.1} parent=1 // loop_header
      %s12 = sphi 0, %s16
      %p13 = scmp.ge.s32.totalorder %s12, 4
      %s19 = sphi 0, %s31
      %s20 = sphi 0, %s27
      %s21 = sphi 0, %s19
      %s22 = sphi 0, %s20
      %s23 = sphi 0, %s21
      %s24 = sphi 0, %s22
      %s34 = sphi 0, %s36
      %s37 = sphi 0, %s34
      %s38 = sphi 0, %s37
      %s54 = sphi 0, %s38
      %s58 = sphi 0, %s58
      %s60 = sphi 0, %s58
      %s61 = sphi 0, %s60
      %s75 = sphi 0, %s61
      %s79 = sphi 0, %s79
      %s81 = sphi 0, %s79
      %s82 = sphi 0, %s81
      %s96 = sphi 0, %s82
      %s104 = sphi 0, %s106
      %s107 = sphi 0, %s104
      %s108 = sphi 0, %s107
      %s124 = sphi 0, %s108
    $region4: #{tpu_custom_call.1} parent=1 // loop_header_branch
      %15 = sbr.rel (%p13) target = $region8
    $region5: #{tpu_custom_call.1} parent=1 // loop_body
      %s17 = ssub.s32 %s12, 1
      %s18 = ssub.s32 %s12, 2
      %s25 = sadd.s32 1, %s20
      %p26 = scmp.ge.s32.totalorder %s25, 1
      %s27 = scalar_select %p26, 0, %s25
      %s28 = sadd.s32 1, %s19
      %s29 = scalar_select %p26, %s28, %s19
      %p30 = scmp.ge.s32.totalorder %s29, 2
      %s31 = scalar_select %p30, 0, %s29
      %s32 = ssub.s32 %s19, %s31
      %p33 = scmp.eq.s32.totalorder %s32, 0
      %s35 = sadd.s32 %s34, 1
      %s36 = scalar_select %p33, %s34, %s35
      %p39 = pneg %p33
      %p40 = scmp.eq.s32.totalorder %s12, 1
      %p41 = por %p39, %p40
      %p42 = scmp.ne.s32.totalorder %s34, %s37
      %p43 = scmp.eq.s32.totalorder %s12, 0
      %p44 = por %p42, %p43
      %p45 = scmp.ne.s32.totalorder %s34, %s37
      %p46 = scmp.eq.s32.totalorder %s17, 1
      %p47 = por %p45, %p46
      %p48 = scmp.ne.s32.totalorder %s37, %s38
      %p49 = scmp.eq.s32.totalorder %s17, 0
      %p50 = por %p48, %p49
      %p51 = scmp.ne.s32.totalorder %s37, %s38
      %p52 = scmp.eq.s32.totalorder %s18, 1
      %p53 = por %p51, %p52
      %p55 = scmp.ne.s32.totalorder %s38, %s54
      %p56 = scmp.eq.s32.totalorder %s18, 0
      %p57 = por %p55, %p56
      %s59 = sadd.s32 %s58, 1
      %p62 = scmp.eq.s32.totalorder %s12, 1
      %p63 = scmp.ne.s32.totalorder %s58, %s60
      %p64 = scmp.eq.s32.totalorder %s12, 0
      %p65 = por %p63, %p64
      %p66 = scmp.ne.s32.totalorder %s58, %s60
      %p67 = scmp.eq.s32.totalorder %s17, 1
      %p68 = por %p66, %p67
      %p69 = scmp.ne.s32.totalorder %s60, %s61
      %p70 = scmp.eq.s32.totalorder %s17, 0
      %p71 = por %p69, %p70
      %p72 = scmp.ne.s32.totalorder %s60, %s61
      %p73 = scmp.eq.s32.totalorder %s18, 1
      %p74 = por %p72, %p73
      %p76 = scmp.ne.s32.totalorder %s61, %s75
      %p77 = scmp.eq.s32.totalorder %s18, 0
      %p78 = por %p76, %p77
      %s80 = sadd.s32 %s79, 1
      %p83 = scmp.eq.s32.totalorder %s12, 1
      %p84 = scmp.ne.s32.totalorder %s79, %s81
      %p85 = scmp.eq.s32.totalorder %s12, 0
      %p86 = por %p84, %p85
      %p87 = scmp.ne.s32.totalorder %s79, %s81
      %p88 = scmp.eq.s32.totalorder %s17, 1
      %p89 = por %p87, %p88
      %p90 = scmp.ne.s32.totalorder %s81, %s82
      %p91 = scmp.eq.s32.totalorder %s17, 0
      %p92 = por %p90, %p91
      %p93 = scmp.ne.s32.totalorder %s81, %s82
      %p94 = scmp.eq.s32.totalorder %s18, 1
      %p95 = por %p93, %p94
      %p97 = scmp.ne.s32.totalorder %s82, %s96
      %p98 = scmp.eq.s32.totalorder %s18, 0
      %p99 = por %p97, %p98
      %s100 = ssub.s32 %s19, %s31
      %s101 = ssub.s32 %s20, %s27
      %s102 = sor.u32 %s100, %s101
      %p103 = scmp.eq.s32.totalorder %s102, 0
      %s105 = sadd.s32 %s104, 1
      %s106 = scalar_select %p103, %s104, %s105
      %p109 = pneg %p103
      %p110 = scmp.eq.s32.totalorder %s12, 1
      %p111 = por %p109, %p110
      %p112 = scmp.ne.s32.totalorder %s104, %s107
      %p113 = scmp.eq.s32.totalorder %s12, 0
      %p114 = por %p112, %p113
      %p115 = scmp.ne.s32.totalorder %s104, %s107
      %p116 = scmp.eq.s32.totalorder %s17, 1
      %p117 = por %p115, %p116
      %p118 = scmp.ne.s32.totalorder %s107, %s108
      %p119 = scmp.eq.s32.totalorder %s17, 0
      %p120 = por %p118, %p119
      %p121 = scmp.ne.s32.totalorder %s107, %s108
      %p122 = scmp.eq.s32.totalorder %s18, 1
      %p123 = por %p121, %p122
      %p125 = scmp.ne.s32.totalorder %s108, %s124
      %p126 = scmp.eq.s32.totalorder %s18, 0
      %p127 = por %p125, %p126
      %p128 = scmp.le.s32.totalorder 1, %s12
      %p129 = scmp.lt.s32.totalorder %s12, 3
      %p130 = pnand %p128, %p129
      %p131 = pneg %p130
      // Predicated region
      $region9: #{tpu_custom_call.1} parent=5 // pred_check
        _
      $region10: #{tpu_custom_call.1} parent=5 // pred_check_branch
        %133 = sbr.rel (%p130) target = $region12
      $region11: #{tpu_custom_call.1} parent=5 // pred_region
        %s134 = ssub.s32 %s12, 1
        // Predicated region
        $region13: #{tpu_custom_call.1} parent=11 // pred_check
          %p135 = pneg %p71
        $region14: #{tpu_custom_call.1} parent=11 // pred_check_branch
          %137 = sbr.rel (%p135) target = $region16
        $region15: #{tpu_custom_call.1} parent=11 // pred_region
          _
        $region16: #{tpu_custom_call.1} parent=11 // pred_fallthru
          _
        // Predicated region
        $region17: #{tpu_custom_call.1} parent=11 // pred_check
          %p138 = pneg %p92
        $region18: #{tpu_custom_call.1} parent=11 // pred_check_branch
          %140 = sbr.rel (%p138) target = $region20
        $region19: #{tpu_custom_call.1} parent=11 // pred_region
          _
        $region20: #{tpu_custom_call.1} parent=11 // pred_fallthru
          _
      $region12: #{tpu_custom_call.1} parent=5 // pred_fallthru
        _
      %p141 = scmp.lt.s32.totalorder %s12, 2
      // Predicated region
      $region21: #{tpu_custom_call.1} parent=5 // pred_check
        %p142 = pneg %p141
      $region22: #{tpu_custom_call.1} parent=5 // pred_check_branch
        %144 = sbr.rel (%p142) target = $region24
      $region23: #{tpu_custom_call.1} parent=5 // pred_region
        // Predicated region
        $region25: #{tpu_custom_call.1} parent=23 // pred_check
          %p145 = pneg %p44
        $region26: #{tpu_custom_call.1} parent=23 // pred_check_branch
          %147 = sbr.rel (%p145) target = $region28
        $region27: #{tpu_custom_call.1} parent=23 // pred_region
          %p148 = scmp.lt.s32.totalorder %s19, 1
          %s149 = scalar_select %p148, %s19, 1
          %s150 = smul.addr %s149, 54
          %s151 = smul.addr %s150, 8
          %s152 = scalar_lea.vmem %s0, %s151
        $region28: #{tpu_custom_call.1} parent=23 // pred_fallthru
          _
      $region24: #{tpu_custom_call.1} parent=5 // pred_fallthru
        _
      %p153 = scmp.le.s32.totalorder 1, %s12
      %p154 = scmp.lt.s32.totalorder %s12, 3
      %p155 = pnand %p153, %p154
      %p156 = pneg %p155
      // Predicated region
      $region29: #{tpu_custom_call.1} parent=5 // pred_check
        _
      $region30: #{tpu_custom_call.1} parent=5 // pred_check_branch
        %158 = sbr.rel (%p155) target = $region32
      $region31: #{tpu_custom_call.1} parent=5 // pred_region
        %s159 = ssub.s32 %s12, 1
        %p160 = scmp.lt.s32.totalorder %s21, 1
        %s161 = scalar_select %p160, %s21, 1
        %s162 = smul.addr %s161, 54
        %s163 = smul.addr %s162, 8
        %s164 = scalar_lea.vmem %s0, %s163
        %p165 = pneg %p50
        %p166 = pneg %p47
        %p167 = pneg %p71
        %p168 = pneg %p68
        %p169 = pneg %p92
        %p170 = pneg %p89
        %p171 = pneg %p120
        %p172 = pneg %p117
        %s173 = sand.u32 %s107, 1
        %s174 = scalar_lea.sflag [#allocation3], %s173
        %s175 = sand.u32 %s107, 1
        %s176 = smul.addr %s175, 256
        %s177 = scalar_lea.vmem [#allocation2], %s176
        %p178 = scmp.lt.s32.totalorder %s21, 1
        %s179 = scalar_select %p178, %s21, 1
        %s180 = smul.addr %s179, 54
        %s181 = smul.addr %s180, 8
        %s182 = scalar_lea.vmem %s0, %s181
        %s183 = smul.u32 16, %s22
        %s184 = smul.u32 %s22, 16
        %v185 = vld [vmem:[%s1] sm:$0x7]
        %v186 = vld [vmem:[%s1 + $0x4] sm:$0x7]
        %v187 = vld [vmem:[%s1 + $0x8] sm:$0x7]
        %v188 = vld [vmem:[%s2] sm:$0xff]
        %v189 = vld [vmem:[%s2 + $0x8] sm:$0xff]
        %v190 = vld [vmem:[%s2 + $0x10] sm:$0xff]
        %v191 = vld [vmem:[%s2 + $0x18] sm:$0xff]
        %v192 = vld [vmem:[%s2 + $0x20] sm:$0xff]
        %v193 = vld [vmem:[%s2 + $0x28] sm:$0xff]
        %v194 = vld [vmem:[%s2 + $0x30] sm:$0xff]
        %v195 = vld [vmem:[%s2 + $0x38] sm:$0xff]
        %v196 = vld [vmem:[%s2 + $0x40] sm:$0xff]
        %v197 = vld [vmem:[%s2 + $0x48] sm:$0xff]
        %v198 = vld [vmem:[%s2 + $0x50] sm:$0xff]
        %v199 = vld [vmem:[%s2 + $0x58] sm:$0xff]
        %v200 = vld [vmem:[%s2 + $0x60] sm:$0xff]
        %v201 = vld [vmem:[%s2 + $0x68] sm:$0xff]
        %v202 = vld [vmem:[%s2 + $0x70] sm:$0xff]
        %v203 = vld [vmem:[%s2 + $0x78] sm:$0xff]
        loop: start=0, step=1, limit=2
        $region33: #{tpu_custom_call.1} parent=31 // loop_pre_header
          _
        $region34: #{tpu_custom_call.1} parent=31 // loop_header
          %s205 = sphi 0, %s209
          %p206 = scmp.ge.s32.totalorder %s205, 2
        $region35: #{tpu_custom_call.1} parent=31 // loop_header_branch
          %208 = sbr.rel (%p206) target = $region39
        $region36: #{tpu_custom_call.1} parent=31 // loop_body
          %s210 = smul.u32 %s205, 8
          %s211 = sadd.s32 %s184, %s210
          %s212 = smul.u32 %s211, 24
          %s213 = scalar_lea.vmem %s182, %s212
          %v214 = vld [vmem:[%s213] sm:$0xff]
          %v215 = vld [vmem:[%s213 + $0x8] sm:$0xff]
          %v216 = vld [vmem:[%s213 + $0x10] sm:$0x3]
          %v217 = vld [vmem:[%s213 + $0x18] sm:$0xff]
          %v218 = vld [vmem:[%s213 + $0x20] sm:$0xff]
          %v219 = vld [vmem:[%s213 + $0x28] sm:$0x3]
          %v220 = vld [vmem:[%s213 + $0x30] sm:$0xff]
          %v221 = vld [vmem:[%s213 + $0x38] sm:$0xff]
          %v222 = vld [vmem:[%s213 + $0x40] sm:$0x3]
          %v223 = vld [vmem:[%s213 + $0x48] sm:$0xff]
          %v224 = vld [vmem:[%s213 + $0x50] sm:$0xff]
          %v225 = vld [vmem:[%s213 + $0x58] sm:$0x3]
          %v226 = vld [vmem:[%s213 + $0x60] sm:$0xff]
          %v227 = vld [vmem:[%s213 + $0x68] sm:$0xff]
          %v228 = vld [vmem:[%s213 + $0x70] sm:$0x3]
          %v229 = vld [vmem:[%s213 + $0x78] sm:$0xff]
          %v230 = vld [vmem:[%s213 + $0x80] sm:$0xff]
          %v231 = vld [vmem:[%s213 + $0x88] sm:$0x3]
          %v232 = vld [vmem:[%s213 + $0x90] sm:$0xff]
          %v233 = vld [vmem:[%s213 + $0x98] sm:$0xff]
          %v234 = vld [vmem:[%s213 + $0xa0] sm:$0x3]
          %v235 = vld [vmem:[%s213 + $0xa8] sm:$0xff]
          %v236 = vld [vmem:[%s213 + $0xb0] sm:$0xff]
          %v237 = vld [vmem:[%s213 + $0xb8] sm:$0x3]
          %v238 = vld [vmem:[%s213 + $0xc0] sm:$0xff]
          %v239 = vld [vmem:[%s213 + $0xc8] sm:$0xff]
          %v240 = vld [vmem:[%s213 + $0xd0] sm:$0x3]
          %v241 = vld [vmem:[%s213 + $0xd8] sm:$0xff]
          %v242 = vld [vmem:[%s213 + $0xe0] sm:$0xff]
          %v243 = vld [vmem:[%s213 + $0xe8] sm:$0x3]
          %v244 = vlaneseq
          %v245 = vshrl.u32 %v244, 7
          %v246 = vsub.s32 0, %v245
          %v247 = vrot.slane %v185, %v246
          %v248 = vmul.f32 %v214, %v247
          %v249 = vmul.f32 %v215, %v247
          %v250 = vmul.f32 %v217, %v247
          %v251 = vmul.f32 %v218, %v247
          %v252 = vmul.f32 %v220, %v247
          %v253 = vmul.f32 %v221, %v247
          %v254 = vmul.f32 %v223, %v247
          %v255 = vmul.f32 %v224, %v247
          %v256 = vmul.f32 %v226, %v247
          %v257 = vmul.f32 %v227, %v247
          %v258 = vmul.f32 %v229, %v247
          %v259 = vmul.f32 %v230, %v247
          %v260 = vmul.f32 %v232, %v247
          %v261 = vmul.f32 %v233, %v247
          %v262 = vmul.f32 %v235, %v247
          %v263 = vmul.f32 %v236, %v247
          %v264 = vadd.f32 %v248, 0.0
          %v265 = vadd.f32 %v249, 0.0
          %v266 = vadd.f32 %v250, 0.0
          %v267 = vadd.f32 %v251, 0.0
          %v268 = vadd.f32 %v252, 0.0
          %v269 = vadd.f32 %v253, 0.0
          %v270 = vadd.f32 %v254, 0.0
          %v271 = vadd.f32 %v255, 0.0
          %v272 = vadd.f32 %v256, 0.0
          %v273 = vadd.f32 %v257, 0.0
          %v274 = vadd.f32 %v258, 0.0
          %v275 = vadd.f32 %v259, 0.0
          %v276 = vadd.f32 %v260, 0.0
          %v277 = vadd.f32 %v261, 0.0
          %v278 = vadd.f32 %v262, 0.0
          %v279 = vadd.f32 %v263, 0.0
          %v280 = vlaneseq
          %v281 = vshrl.u32 %v280, 7
          %v282 = vsub.s32 0, %v281
          %v283 = vrot.slane %v186, %v282
          %v284 = vmul.f32 %v217, %v283
          %v285 = vmul.f32 %v218, %v283
          %v286 = vmul.f32 %v220, %v283
          %v287 = vmul.f32 %v221, %v283
          %v288 = vmul.f32 %v223, %v283
          %v289 = vmul.f32 %v224, %v283
          %v290 = vmul.f32 %v226, %v283
          %v291 = vmul.f32 %v227, %v283
          %v292 = vmul.f32 %v229, %v283
          %v293 = vmul.f32 %v230, %v283
          %v294 = vmul.f32 %v232, %v283
          %v295 = vmul.f32 %v233, %v283
          %v296 = vmul.f32 %v235, %v283
          %v297 = vmul.f32 %v236, %v283
          %v298 = vmul.f32 %v238, %v283
          %v299 = vmul.f32 %v239, %v283
          %v300 = vadd.f32 %v264, %v284
          %v301 = vadd.f32 %v265, %v285
          %v302 = vadd.f32 %v266, %v286
          %v303 = vadd.f32 %v267, %v287
          %v304 = vadd.f32 %v268, %v288
          %v305 = vadd.f32 %v269, %v289
          %v306 = vadd.f32 %v270, %v290
          %v307 = vadd.f32 %v271, %v291
          %v308 = vadd.f32 %v272, %v292
          %v309 = vadd.f32 %v273, %v293
          %v310 = vadd.f32 %v274, %v294
          %v311 = vadd.f32 %v275, %v295
          %v312 = vadd.f32 %v276, %v296
          %v313 = vadd.f32 %v277, %v297
          %v314 = vadd.f32 %v278, %v298
          %v315 = vadd.f32 %v279, %v299
          %v316 = vlaneseq
          %v317 = vshrl.u32 %v316, 7
          %v318 = vsub.s32 0, %v317
          %v319 = vrot.slane %v187, %v318
          %v320 = vmul.f32 %v220, %v319
          %v321 = vmul.f32 %v221, %v319
          %v322 = vmul.f32 %v223, %v319
          %v323 = vmul.f32 %v224, %v319
          %v324 = vmul.f32 %v226, %v319
          %v325 = vmul.f32 %v227, %v319
          %v326 = vmul.f32 %v229, %v319
          %v327 = vmul.f32 %v230, %v319
          %v328 = vmul.f32 %v232, %v319
          %v329 = vmul.f32 %v233, %v319
          %v330 = vmul.f32 %v235, %v319
          %v331 = vmul.f32 %v236, %v319
          %v332 = vmul.f32 %v238, %v319
          %v333 = vmul.f32 %v239, %v319
          %v334 = vmul.f32 %v241, %v319
          %v335 = vmul.f32 %v242, %v319
          %v336 = vadd.f32 %v300, %v320
          %v337 = vadd.f32 %v301, %v321
          %v338 = vadd.f32 %v302, %v322
          %v339 = vadd.f32 %v303, %v323
          %v340 = vadd.f32 %v304, %v324
          %v341 = vadd.f32 %v305, %v325
          %v342 = vadd.f32 %v306, %v326
          %v343 = vadd.f32 %v307, %v327
          %v344 = vadd.f32 %v308, %v328
          %v345 = vadd.f32 %v309, %v329
          %v346 = vadd.f32 %v310, %v330
          %v347 = vadd.f32 %v311, %v331
          %v348 = vadd.f32 %v312, %v332
          %v349 = vadd.f32 %v313, %v333
          %v350 = vadd.f32 %v314, %v334
          %v351 = vadd.f32 %v315, %v335
          %v352 = vlaneseq
          %v353 = vshrl.u32 %v352, 7
          %v354 = vsub.s32 1, %v353
          %v355 = vrot.slane %v185, %v354
          %v356 = vmul.f32 %v214, %v355
          %v357 = vmul.f32 %v215, %v355
          %v358 = vmul.f32 %v216, %v355
          %v359 = vmul.f32 %v217, %v355
          %v360 = vmul.f32 %v218, %v355
          %v361 = vmul.f32 %v219, %v355
          %v362 = vmul.f32 %v220, %v355
          %v363 = vmul.f32 %v221, %v355
          %v364 = vmul.f32 %v222, %v355
          %v365 = vmul.f32 %v223, %v355
          %v366 = vmul.f32 %v224, %v355
          %v367 = vmul.f32 %v225, %v355
          %v368 = vmul.f32 %v226, %v355
          %v369 = vmul.f32 %v227, %v355
          %v370 = vmul.f32 %v228, %v355
          %v371 = vmul.f32 %v229, %v355
          %v372 = vmul.f32 %v230, %v355
          %v373 = vmul.f32 %v231, %v355
          %v374 = vmul.f32 %v232, %v355
          %v375 = vmul.f32 %v233, %v355
          %v376 = vmul.f32 %v234, %v355
          %v377 = vmul.f32 %v235, %v355
          %v378 = vmul.f32 %v236, %v355
          %v379 = vmul.f32 %v237, %v355
          %vm404 = vcmask 1046528
          %v405 = vrot.slane %v356, 1
          %v406 = vrot.slane %v357, 1
          %v407 = vsel %vm404, %v405, %v406
          %v408 = vrot.slane %v358, 1
          %v409 = vsel %vm404, %v406, %v408
          %v410 = vrot.slane %v359, 1
          %v411 = vrot.slane %v360, 1
          %v412 = vsel %vm404, %v410, %v411
          %v413 = vrot.slane %v361, 1
          %v414 = vsel %vm404, %v411, %v413
          %v415 = vrot.slane %v362, 1
          %v416 = vrot.slane %v363, 1
          %v417 = vsel %vm404, %v415, %v416
          %v418 = vrot.slane %v364, 1
          %v419 = vsel %vm404, %v416, %v418
          %v420 = vrot.slane %v365, 1
          %v421 = vrot.slane %v366, 1
          %v422 = vsel %vm404, %v420, %v421
          %v423 = vrot.slane %v367, 1
          %v424 = vsel %vm404, %v421, %v423
          %v425 = vrot.slane %v368, 1
          %v426 = vrot.slane %v369, 1
          %v427 = vsel %vm404, %v425, %v426
          %v428 = vrot.slane %v370, 1
          %v429 = vsel %vm404, %v426, %v428
          %v430 = vrot.slane %v371, 1
          %v431 = vrot.slane %v372, 1
          %v432 = vsel %vm404, %v430, %v431
          %v433 = vrot.slane %v373, 1
          %v434 = vsel %vm404, %v431, %v433
          %v435 = vrot.slane %v374, 1
          %v436 = vrot.slane %v375, 1
          %v437 = vsel %vm404, %v435, %v436
          %v438 = vrot.slane %v376, 1
          %v439 = vsel %vm404, %v436, %v438
          %v440 = vrot.slane %v377, 1
          %v441 = vrot.slane %v378, 1
          %v442 = vsel %vm404, %v440, %v441
          %v443 = vrot.slane %v379, 1
          %v444 = vsel %vm404, %v441, %v443
          %v461 = vadd.f32 %v336, %v407
          %v462 = vadd.f32 %v337, %v409
          %v463 = vadd.f32 %v338, %v412
          %v464 = vadd.f32 %v339, %v414
          %v465 = vadd.f32 %v340, %v417
          %v466 = vadd.f32 %v341, %v419
          %v467 = vadd.f32 %v342, %v422
          %v468 = vadd.f32 %v343, %v424
          %v469 = vadd.f32 %v344, %v427
          %v470 = vadd.f32 %v345, %v429
          %v471 = vadd.f32 %v346, %v432
          %v472 = vadd.f32 %v347, %v434
          %v473 = vadd.f32 %v348, %v437
          %v474 = vadd.f32 %v349, %v439
          %v475 = vadd.f32 %v350, %v442
          %v476 = vadd.f32 %v351, %v444
          %v477 = vlaneseq
          %v478 = vshrl.u32 %v477, 7
          %v479 = vsub.s32 1, %v478
          %v480 = vrot.slane %v186, %v479
          %v481 = vmul.f32 %v217, %v480
          %v482 = vmul.f32 %v218, %v480
          %v483 = vmul.f32 %v219, %v480
          %v484 = vmul.f32 %v220, %v480
          %v485 = vmul.f32 %v221, %v480
          %v486 = vmul.f32 %v222, %v480
          %v487 = vmul.f32 %v223, %v480
          %v488 = vmul.f32 %v224, %v480
          %v489 = vmul.f32 %v225, %v480
          %v490 = vmul.f32 %v226, %v480
          %v491 = vmul.f32 %v227, %v480
          %v492 = vmul.f32 %v228, %v480
          %v493 = vmul.f32 %v229, %v480
          %v494 = vmul.f32 %v230, %v480
          %v495 = vmul.f32 %v231, %v480
          %v496 = vmul.f32 %v232, %v480
          %v497 = vmul.f32 %v233, %v480
          %v498 = vmul.f32 %v234, %v480
          %v499 = vmul.f32 %v235, %v480
          %v500 = vmul.f32 %v236, %v480
          %v501 = vmul.f32 %v237, %v480
          %v502 = vmul.f32 %v238, %v480
          %v503 = vmul.f32 %v239, %v480
          %v504 = vmul.f32 %v240, %v480
          %v529 = vrot.slane %v481, 1
          %v530 = vrot.slane %v482, 1
          %v531 = vsel %vm404, %v529, %v530
          %v532 = vrot.slane %v483, 1
          %v533 = vsel %vm404, %v530, %v532
          %v534 = vrot.slane %v484, 1
          %v535 = vrot.slane %v485, 1
          %v536 = vsel %vm404, %v534, %v535
          %v537 = vrot.slane %v486, 1
          %v538 = vsel %vm404, %v535, %v537
          %v539 = vrot.slane %v487, 1
          %v540 = vrot.slane %v488, 1
          %v541 = vsel %vm404, %v539, %v540
          %v542 = vrot.slane %v489, 1
          %v543 = vsel %vm404, %v540, %v542
          %v544 = vrot.slane %v490, 1
          %v545 = vrot.slane %v491, 1
          %v546 = vsel %vm404, %v544, %v545
          %v547 = vrot.slane %v492, 1
          %v548 = vsel %vm404, %v545, %v547
          %v549 = vrot.slane %v493, 1
          %v550 = vrot.slane %v494, 1
          %v551 = vsel %vm404, %v549, %v550
          %v552 = vrot.slane %v495, 1
          %v553 = vsel %vm404, %v550, %v552
          %v554 = vrot.slane %v496, 1
          %v555 = vrot.slane %v497, 1
          %v556 = vsel %vm404, %v554, %v555
          %v557 = vrot.slane %v498, 1
          %v558 = vsel %vm404, %v555, %v557
          %v559 = vrot.slane %v499, 1
          %v560 = vrot.slane %v500, 1
          %v561 = vsel %vm404, %v559, %v560
          %v562 = vrot.slane %v501, 1
          %v563 = vsel %vm404, %v560, %v562
          %v564 = vrot.slane %v502, 1
          %v565 = vrot.slane %v503, 1
          %v566 = vsel %vm404, %v564, %v565
          %v567 = vrot.slane %v504, 1
          %v568 = vsel %vm404, %v565, %v567
          %v585 = vadd.f32 %v461, %v531
          %v586 = vadd.f32 %v462, %v533
          %v587 = vadd.f32 %v463, %v536
          %v588 = vadd.f32 %v464, %v538
          %v589 = vadd.f32 %v465, %v541
          %v590 = vadd.f32 %v466, %v543
          %v591 = vadd.f32 %v467, %v546
          %v592 = vadd.f32 %v468, %v548
          %v593 = vadd.f32 %v469, %v551
          %v594 = vadd.f32 %v470, %v553
          %v595 = vadd.f32 %v471, %v556
          %v596 = vadd.f32 %v472, %v558
          %v597 = vadd.f32 %v473, %v561
          %v598 = vadd.f32 %v474, %v563
          %v599 = vadd.f32 %v475, %v566
          %v600 = vadd.f32 %v476, %v568
          %v601 = vlaneseq
          %v602 = vshrl.u32 %v601, 7
          %v603 = vsub.s32 1, %v602
          %v604 = vrot.slane %v187, %v603
          %v605 = vmul.f32 %v220, %v604
          %v606 = vmul.f32 %v221, %v604
          %v607 = vmul.f32 %v222, %v604
          %v608 = vmul.f32 %v223, %v604
          %v609 = vmul.f32 %v224, %v604
          %v610 = vmul.f32 %v225, %v604
          %v611 = vmul.f32 %v226, %v604
          %v612 = vmul.f32 %v227, %v604
          %v613 = vmul.f32 %v228, %v604
          %v614 = vmul.f32 %v229, %v604
          %v615 = vmul.f32 %v230, %v604
          %v616 = vmul.f32 %v231, %v604
          %v617 = vmul.f32 %v232, %v604
          %v618 = vmul.f32 %v233, %v604
          %v619 = vmul.f32 %v234, %v604
          %v620 = vmul.f32 %v235, %v604
          %v621 = vmul.f32 %v236, %v604
          %v622 = vmul.f32 %v237, %v604
          %v623 = vmul.f32 %v238, %v604
          %v624 = vmul.f32 %v239, %v604
          %v625 = vmul.f32 %v240, %v604
          %v626 = vmul.f32 %v241, %v604
          %v627 = vmul.f32 %v242, %v604
          %v628 = vmul.f32 %v243, %v604
          %v653 = vrot.slane %v605, 1
          %v654 = vrot.slane %v606, 1
          %v655 = vsel %vm404, %v653, %v654
          %v656 = vrot.slane %v607, 1
          %v657 = vsel %vm404, %v654, %v656
          %v658 = vrot.slane %v608, 1
          %v659 = vrot.slane %v609, 1
          %v660 = vsel %vm404, %v658, %v659
          %v661 = vrot.slane %v610, 1
          %v662 = vsel %vm404, %v659, %v661
          %v663 = vrot.slane %v611, 1
          %v664 = vrot.slane %v612, 1
          %v665 = vsel %vm404, %v663, %v664
          %v666 = vrot.slane %v613, 1
          %v667 = vsel %vm404, %v664, %v666
          %v668 = vrot.slane %v614, 1
          %v669 = vrot.slane %v615, 1
          %v670 = vsel %vm404, %v668, %v669
          %v671 = vrot.slane %v616, 1
          %v672 = vsel %vm404, %v669, %v671
          %v673 = vrot.slane %v617, 1
          %v674 = vrot.slane %v618, 1
          %v675 = vsel %vm404, %v673, %v674
          %v676 = vrot.slane %v619, 1
          %v677 = vsel %vm404, %v674, %v676
          %v678 = vrot.slane %v620, 1
          %v679 = vrot.slane %v621, 1
          %v680 = vsel %vm404, %v678, %v679
          %v681 = vrot.slane %v622, 1
          %v682 = vsel %vm404, %v679, %v681
          %v683 = vrot.slane %v623, 1
          %v684 = vrot.slane %v624, 1
          %v685 = vsel %vm404, %v683, %v684
          %v686 = vrot.slane %v625, 1
          %v687 = vsel %vm404, %v684, %v686
          %v688 = vrot.slane %v626, 1
          %v689 = vrot.slane %v627, 1
          %v690 = vsel %vm404, %v688, %v689
          %v691 = vrot.slane %v628, 1
          %v692 = vsel %vm404, %v689, %v691
          %v709 = vadd.f32 %v585, %v655
          %v710 = vadd.f32 %v586, %v657
          %v711 = vadd.f32 %v587, %v660
          %v712 = vadd.f32 %v588, %v662
          %v713 = vadd.f32 %v589, %v665
          %v714 = vadd.f32 %v590, %v667
          %v715 = vadd.f32 %v591, %v670
          %v716 = vadd.f32 %v592, %v672
          %v717 = vadd.f32 %v593, %v675
          %v718 = vadd.f32 %v594, %v677
          %v719 = vadd.f32 %v595, %v680
          %v720 = vadd.f32 %v596, %v682
          %v721 = vadd.f32 %v597, %v685
          %v722 = vadd.f32 %v598, %v687
          %v723 = vadd.f32 %v599, %v690
          %v724 = vadd.f32 %v600, %v692
          %v725 = vlaneseq
          %v726 = vshrl.u32 %v725, 7
          %v727 = vsub.s32 2, %v726
          %v728 = vrot.slane %v185, %v727
          %v729 = vmul.f32 %v214, %v728
          %v730 = vmul.f32 %v215, %v728
          %v731 = vmul.f32 %v216, %v728
          %v732 = vmul.f32 %v217, %v728
          %v733 = vmul.f32 %v218, %v728
          %v734 = vmul.f32 %v219, %v728
          %v735 = vmul.f32 %v220, %v728
          %v736 = vmul.f32 %v221, %v728
          %v737 = vmul.f32 %v222, %v728
          %v738 = vmul.f32 %v223, %v728
          %v739 = vmul.f32 %v224, %v728
          %v740 = vmul.f32 %v225, %v728
          %v741 = vmul.f32 %v226, %v728
          %v742 = vmul.f32 %v227, %v728
          %v743 = vmul.f32 %v228, %v728
          %v744 = vmul.f32 %v229, %v728
          %v745 = vmul.f32 %v230, %v728
          %v746 = vmul.f32 %v231, %v728
          %v747 = vmul.f32 %v232, %v728
          %v748 = vmul.f32 %v233, %v728
          %v749 = vmul.f32 %v234, %v728
          %v750 = vmul.f32 %v235, %v728
          %v751 = vmul.f32 %v236, %v728
          %v752 = vmul.f32 %v237, %v728
          %vm777 = vcmask 1045504
          %v778 = vrot.slane %v729, 2
          %v779 = vrot.slane %v730, 2
          %v780 = vsel %vm777, %v778, %v779
          %v781 = vrot.slane %v731, 2
          %v782 = vsel %vm777, %v779, %v781
          %v783 = vrot.slane %v732, 2
          %v784 = vrot.slane %v733, 2
          %v785 = vsel %vm777, %v783, %v784
          %v786 = vrot.slane %v734, 2
          %v787 = vsel %vm777, %v784, %v786
          %v788 = vrot.slane %v735, 2
          %v789 = vrot.slane %v736, 2
          %v790 = vsel %vm777, %v788, %v789
          %v791 = vrot.slane %v737, 2
          %v792 = vsel %vm777, %v789, %v791
          %v793 = vrot.slane %v738, 2
          %v794 = vrot.slane %v739, 2
          %v795 = vsel %vm777, %v793, %v794
          %v796 = vrot.slane %v740, 2
          %v797 = vsel %vm777, %v794, %v796
          %v798 = vrot.slane %v741, 2
          %v799 = vrot.slane %v742, 2
          %v800 = vsel %vm777, %v798, %v799
          %v801 = vrot.slane %v743, 2
          %v802 = vsel %vm777, %v799, %v801
          %v803 = vrot.slane %v744, 2
          %v804 = vrot.slane %v745, 2
          %v805 = vsel %vm777, %v803, %v804
          %v806 = vrot.slane %v746, 2
          %v807 = vsel %vm777, %v804, %v806
          %v808 = vrot.slane %v747, 2
          %v809 = vrot.slane %v748, 2
          %v810 = vsel %vm777, %v808, %v809
          %v811 = vrot.slane %v749, 2
          %v812 = vsel %vm777, %v809, %v811
          %v813 = vrot.slane %v750, 2
          %v814 = vrot.slane %v751, 2
          %v815 = vsel %vm777, %v813, %v814
          %v816 = vrot.slane %v752, 2
          %v817 = vsel %vm777, %v814, %v816
          %v834 = vadd.f32 %v709, %v780
          %v835 = vadd.f32 %v710, %v782
          %v836 = vadd.f32 %v711, %v785
          %v837 = vadd.f32 %v712, %v787
          %v838 = vadd.f32 %v713, %v790
          %v839 = vadd.f32 %v714, %v792
          %v840 = vadd.f32 %v715, %v795
          %v841 = vadd.f32 %v716, %v797
          %v842 = vadd.f32 %v717, %v800
          %v843 = vadd.f32 %v718, %v802
          %v844 = vadd.f32 %v719, %v805
          %v845 = vadd.f32 %v720, %v807
          %v846 = vadd.f32 %v721, %v810
          %v847 = vadd.f32 %v722, %v812
          %v848 = vadd.f32 %v723, %v815
          %v849 = vadd.f32 %v724, %v817
          %v850 = vlaneseq
          %v851 = vshrl.u32 %v850, 7
          %v852 = vsub.s32 2, %v851
          %v853 = vrot.slane %v186, %v852
          %v854 = vmul.f32 %v217, %v853
          %v855 = vmul.f32 %v218, %v853
          %v856 = vmul.f32 %v219, %v853
          %v857 = vmul.f32 %v220, %v853
          %v858 = vmul.f32 %v221, %v853
          %v859 = vmul.f32 %v222, %v853
          %v860 = vmul.f32 %v223, %v853
          %v861 = vmul.f32 %v224, %v853
          %v862 = vmul.f32 %v225, %v853
          %v863 = vmul.f32 %v226, %v853
          %v864 = vmul.f32 %v227, %v853
          %v865 = vmul.f32 %v228, %v853
          %v866 = vmul.f32 %v229, %v853
          %v867 = vmul.f32 %v230, %v853
          %v868 = vmul.f32 %v231, %v853
          %v869 = vmul.f32 %v232, %v853
          %v870 = vmul.f32 %v233, %v853
          %v871 = vmul.f32 %v234, %v853
          %v872 = vmul.f32 %v235, %v853
          %v873 = vmul.f32 %v236, %v853
          %v874 = vmul.f32 %v237, %v853
          %v875 = vmul.f32 %v238, %v853
          %v876 = vmul.f32 %v239, %v853
          %v877 = vmul.f32 %v240, %v853
          %v902 = vrot.slane %v854, 2
          %v903 = vrot.slane %v855, 2
          %v904 = vsel %vm777, %v902, %v903
          %v905 = vrot.slane %v856, 2
          %v906 = vsel %vm777, %v903, %v905
          %v907 = vrot.slane %v857, 2
          %v908 = vrot.slane %v858, 2
          %v909 = vsel %vm777, %v907, %v908
          %v910 = vrot.slane %v859, 2
          %v911 = vsel %vm777, %v908, %v910
          %v912 = vrot.slane %v860, 2
          %v913 = vrot.slane %v861, 2
          %v914 = vsel %vm777, %v912, %v913
          %v915 = vrot.slane %v862, 2
          %v916 = vsel %vm777, %v913, %v915
          %v917 = vrot.slane %v863, 2
          %v918 = vrot.slane %v864, 2
          %v919 = vsel %vm777, %v917, %v918
          %v920 = vrot.slane %v865, 2
          %v921 = vsel %vm777, %v918, %v920
          %v922 = vrot.slane %v866, 2
          %v923 = vrot.slane %v867, 2
          %v924 = vsel %vm777, %v922, %v923
          %v925 = vrot.slane %v868, 2
          %v926 = vsel %vm777, %v923, %v925
          %v927 = vrot.slane %v869, 2
          %v928 = vrot.slane %v870, 2
          %v929 = vsel %vm777, %v927, %v928
          %v930 = vrot.slane %v871, 2
          %v931 = vsel %vm777, %v928, %v930
          %v932 = vrot.slane %v872, 2
          %v933 = vrot.slane %v873, 2
          %v934 = vsel %vm777, %v932, %v933
          %v935 = vrot.slane %v874, 2
          %v936 = vsel %vm777, %v933, %v935
          %v937 = vrot.slane %v875, 2
          %v938 = vrot.slane %v876, 2
          %v939 = vsel %vm777, %v937, %v938
          %v940 = vrot.slane %v877, 2
          %v941 = vsel %vm777, %v938, %v940
          %v958 = vadd.f32 %v834, %v904
          %v959 = vadd.f32 %v835, %v906
          %v960 = vadd.f32 %v836, %v909
          %v961 = vadd.f32 %v837, %v911
          %v962 = vadd.f32 %v838, %v914
          %v963 = vadd.f32 %v839, %v916
          %v964 = vadd.f32 %v840, %v919
          %v965 = vadd.f32 %v841, %v921
          %v966 = vadd.f32 %v842, %v924
          %v967 = vadd.f32 %v843, %v926
          %v968 = vadd.f32 %v844, %v929
          %v969 = vadd.f32 %v845, %v931
          %v970 = vadd.f32 %v846, %v934
          %v971 = vadd.f32 %v847, %v936
          %v972 = vadd.f32 %v848, %v939
          %v973 = vadd.f32 %v849, %v941
          %v974 = vlaneseq
          %v975 = vshrl.u32 %v974, 7
          %v976 = vsub.s32 2, %v975
          %v977 = vrot.slane %v187, %v976
          %v978 = vmul.f32 %v220, %v977
          %v979 = vmul.f32 %v221, %v977
          %v980 = vmul.f32 %v222, %v977
          %v981 = vmul.f32 %v223, %v977
          %v982 = vmul.f32 %v224, %v977
          %v983 = vmul.f32 %v225, %v977
          %v984 = vmul.f32 %v226, %v977
          %v985 = vmul.f32 %v227, %v977
          %v986 = vmul.f32 %v228, %v977
          %v987 = vmul.f32 %v229, %v977
          %v988 = vmul.f32 %v230, %v977
          %v989 = vmul.f32 %v231, %v977
          %v990 = vmul.f32 %v232, %v977
          %v991 = vmul.f32 %v233, %v977
          %v992 = vmul.f32 %v234, %v977
          %v993 = vmul.f32 %v235, %v977
          %v994 = vmul.f32 %v236, %v977
          %v995 = vmul.f32 %v237, %v977
          %v996 = vmul.f32 %v238, %v977
          %v997 = vmul.f32 %v239, %v977
          %v998 = vmul.f32 %v240, %v977
          %v999 = vmul.f32 %v241, %v977
          %v1000 = vmul.f32 %v242, %v977
          %v1001 = vmul.f32 %v243, %v977
          %v1026 = vrot.slane %v978, 2
          %v1027 = vrot.slane %v979, 2
          %v1028 = vsel %vm777, %v1026, %v1027
          %v1029 = vrot.slane %v980, 2
          %v1030 = vsel %vm777, %v1027, %v1029
          %v1031 = vrot.slane %v981, 2
          %v1032 = vrot.slane %v982, 2
          %v1033 = vsel %vm777, %v1031, %v1032
          %v1034 = vrot.slane %v983, 2
          %v1035 = vsel %vm777, %v1032, %v1034
          %v1036 = vrot.slane %v984, 2
          %v1037 = vrot.slane %v985, 2
          %v1038 = vsel %vm777, %v1036, %v1037
          %v1039 = vrot.slane %v986, 2
          %v1040 = vsel %vm777, %v1037, %v1039
          %v1041 = vrot.slane %v987, 2
          %v1042 = vrot.slane %v988, 2
          %v1043 = vsel %vm777, %v1041, %v1042
          %v1044 = vrot.slane %v989, 2
          %v1045 = vsel %vm777, %v1042, %v1044
          %v1046 = vrot.slane %v990, 2
          %v1047 = vrot.slane %v991, 2
          %v1048 = vsel %vm777, %v1046, %v1047
          %v1049 = vrot.slane %v992, 2
          %v1050 = vsel %vm777, %v1047, %v1049
          %v1051 = vrot.slane %v993, 2
          %v1052 = vrot.slane %v994, 2
          %v1053 = vsel %vm777, %v1051, %v1052
          %v1054 = vrot.slane %v995, 2
          %v1055 = vsel %vm777, %v1052, %v1054
          %v1056 = vrot.slane %v996, 2
          %v1057 = vrot.slane %v997, 2
          %v1058 = vsel %vm777, %v1056, %v1057
          %v1059 = vrot.slane %v998, 2
          %v1060 = vsel %vm777, %v1057, %v1059
          %v1061 = vrot.slane %v999, 2
          %v1062 = vrot.slane %v1000, 2
          %v1063 = vsel %vm777, %v1061, %v1062
          %v1064 = vrot.slane %v1001, 2
          %v1065 = vsel %vm777, %v1062, %v1064
          %v1082 = vadd.f32 %v958, %v1028
          %v1083 = vadd.f32 %v959, %v1030
          %v1084 = vadd.f32 %v960, %v1033
          %v1085 = vadd.f32 %v961, %v1035
          %v1086 = vadd.f32 %v962, %v1038
          %v1087 = vadd.f32 %v963, %v1040
          %v1088 = vadd.f32 %v964, %v1043
          %v1089 = vadd.f32 %v965, %v1045
          %v1090 = vadd.f32 %v966, %v1048
          %v1091 = vadd.f32 %v967, %v1050
          %v1092 = vadd.f32 %v968, %v1053
          %v1093 = vadd.f32 %v969, %v1055
          %v1094 = vadd.f32 %v970, %v1058
          %v1095 = vadd.f32 %v971, %v1060
          %v1096 = vadd.f32 %v972, %v1063
          %v1097 = vadd.f32 %v973, %v1065
          %1098 = vmatprep.subr.mxu0 0.0
          %1099 = vmatpush1.msra.mxu0 %v188
          %1100 = vmatprep.subr.mxu0 0.0
          %1101 = vmatpush1.msra.mxu0 %v189
          %1102 = vmatprep.subr.mxu0 0.0
          %1103 = vmatpush1.msra.mxu0 %v190
          %1104 = vmatprep.subr.mxu0 0.0
          %1105 = vmatpush1.msra.mxu0 %v191
          %1106 = vmatprep.subr.mxu0 0.0
          %1107 = vmatpush1.msra.mxu0 %v192
          %1108 = vmatprep.subr.mxu0 0.0
          %1109 = vmatpush1.msra.mxu0 %v193
          %1110 = vmatprep.subr.mxu0 0.0
          %1111 = vmatpush1.msra.mxu0 %v194
          %1112 = vmatprep.subr.mxu0 0.0
          %1113 = vmatpush1.msra.mxu0 %v195
          %1114 = vmatprep.subr.mxu0 0.0
          %1115 = vmatpush1.msra.mxu0 %v196
          %1116 = vmatprep.subr.mxu0 0.0
          %1117 = vmatpush1.msra.mxu0 %v197
          %1118 = vmatprep.subr.mxu0 0.0
          %1119 = vmatpush1.msra.mxu0 %v198
          %1120 = vmatprep.subr.mxu0 0.0
          %1121 = vmatpush1.msra.mxu0 %v199
          %1122 = vmatprep.subr.mxu0 0.0
          %1123 = vmatpush1.msra.mxu0 %v200
          %1124 = vmatprep.subr.mxu0 0.0
          %1125 = vmatpush1.msra.mxu0 %v201
          %1126 = vmatprep.subr.mxu0 0.0
          %1127 = vmatpush1.msra.mxu0 %v202
          %1128 = vmatprep.subr.mxu0 0.0
          %1129 = vmatpush1.msra.mxu0 %v203
          %1130 = vmatprep.subr.mxu0 0.0
          %1131 = vmatpush1.msra.mxu0 0.0
          %1132 = vmatprep.subr.mxu0 0.0
          %1133 = vmatpush1.msra.mxu0 0.0
          %1134 = vmatprep.subr.mxu0 0.0
          %1135 = vmatpush1.msra.mxu0 0.0
          %1136 = vmatprep.subr.mxu0 0.0
          %1137 = vmatpush1.msra.mxu0 0.0
          %1138 = vmatprep.subr.mxu0 0.0
          %1139 = vmatpush1.msra.mxu0 0.0
          %1140 = vmatprep.subr.mxu0 0.0
          %1141 = vmatpush1.msra.mxu0 0.0
          %1142 = vmatprep.subr.mxu0 0.0
          %1143 = vmatpush1.msra.mxu0 0.0
          %1144 = vmatprep.subr.mxu0 0.0
          %1145 = vmatpush1.msra.mxu0 0.0
          %1146 = vmatprep.subr.mxu0 0.0
          %1147 = vmatpush1.msra.mxu0 0.0
          %1148 = vmatprep.subr.mxu0 0.0
          %1149 = vmatpush1.msra.mxu0 0.0
          %1150 = vmatprep.subr.mxu0 0.0
          %1151 = vmatpush1.msra.mxu0 0.0
          %1152 = vmatprep.subr.mxu0 0.0
          %1153 = vmatpush1.msra.mxu0 0.0
          %1154 = vmatprep.subr.mxu0 0.0
          %1155 = vmatpush1.msra.mxu0 0.0
          %1156 = vmatprep.subr.mxu0 0.0
          %1157 = vmatpush1.msra.mxu0 0.0
          %1158 = vmatprep.subr.mxu0 0.0
          %1159 = vmatpush1.msra.mxu0 0.0
          %1160 = vmatprep.subr.mxu0 0.0
          %1161 = vmatpush1.msra.mxu0 0.0
          %1162 = vmatprep.mubr.f32.mxu0 0.0
          %1163 = vmatmul.mubr.f32.gmra.mrb[0].mxu0 %v1082
          %v1164 = vpop.f32.mrb[0].mxu0
          %v1165 = vadd.f32 0.0, %v1164
          %v1166 = vpop.f32.mrb[0].mxu0
          %1167 = vmatprep.mubr.f32.mxu0 0.0
          %1168 = vmatmul.mubr.f32.gmra.mrb[0].mxu0 %v1083
          %v1169 = vpop.f32.mrb[0].mxu0
          %v1170 = vadd.f32 0.0, %v1169
          %v1171 = vpop.f32.mrb[0].mxu0
          %1172 = vmatprep.mubr.f32.mxu0 0.0
          %1173 = vmatmul.mubr.f32.gmra.mrb[0].mxu0 %v1084
          %v1174 = vpop.f32.mrb[0].mxu0
          %v1175 = vadd.f32 0.0, %v1174
          %v1176 = vpop.f32.mrb[0].mxu0
          %1177 = vmatprep.mubr.f32.mxu0 0.0
          %1178 = vmatmul.mubr.f32.gmra.mrb[0].mxu0 %v1085
          %v1179 = vpop.f32.mrb[0].mxu0
          %v1180 = vadd.f32 0.0, %v1179
          %v1181 = vpop.f32.mrb[0].mxu0
          %1182 = vmatprep.mubr.f32.mxu0 0.0
          %1183 = vmatmul.mubr.f32.gmra.mrb[0].mxu0 %v1086
          %v1184 = vpop.f32.mrb[0].mxu0
          %v1185 = vadd.f32 0.0, %v1184
          %v1186 = vpop.f32.mrb[0].mxu0
          %1187 = vmatprep.mubr.f32.mxu0 0.0
          %1188 = vmatmul.mubr.f32.gmra.mrb[0].mxu0 %v1087
          %v1189 = vpop.f32.mrb[0].mxu0
          %v1190 = vadd.f32 0.0, %v1189
          %v1191 = vpop.f32.mrb[0].mxu0
          %1192 = vmatprep.mubr.f32.mxu0 0.0
          %1193 = vmatmul.mubr.f32.gmra.mrb[0].mxu0 %v1088
          %v1194 = vpop.f32.mrb[0].mxu0
          %v1195 = vadd.f32 0.0, %v1194
          %v1196 = vpop.f32.mrb[0].mxu0
          %1197 = vmatprep.mubr.f32.mxu0 0.0
          %1198 = vmatmul.mubr.f32.gmra.mrb[0].mxu0 %v1089
          %v1199 = vpop.f32.mrb[0].mxu0
          %v1200 = vadd.f32 0.0, %v1199
          %v1201 = vpop.f32.mrb[0].mxu0
          %1202 = vmatprep.mubr.f32.mxu0 0.0
          %1203 = vmatmul.mubr.f32.gmra.mrb[0].mxu0 %v1090
          %v1204 = vpop.f32.mrb[0].mxu0
          %v1205 = vadd.f32 0.0, %v1204
          %v1206 = vpop.f32.mrb[0].mxu0
          %1207 = vmatprep.mubr.f32.mxu0 0.0
          %1208 = vmatmul.mubr.f32.gmra.mrb[0].mxu0 %v1091
          %v1209 = vpop.f32.mrb[0].mxu0
          %v1210 = vadd.f32 0.0, %v1209
          %v1211 = vpop.f32.mrb[0].mxu0
          %1212 = vmatprep.mubr.f32.mxu0 0.0
          %1213 = vmatmul.mubr.f32.gmra.mrb[0].mxu0 %v1092
          %v1214 = vpop.f32.mrb[0].mxu0
          %v1215 = vadd.f32 0.0, %v1214
          %v1216 = vpop.f32.mrb[0].mxu0
          %1217 = vmatprep.mubr.f32.mxu0 0.0
          %1218 = vmatmul.mubr.f32.gmra.mrb[0].mxu0 %v1093
          %v1219 = vpop.f32.mrb[0].mxu0
          %v1220 = vadd.f32 0.0, %v1219
          %v1221 = vpop.f32.mrb[0].mxu0
          %1222 = vmatprep.mubr.f32.mxu0 0.0
          %1223 = vmatmul.mubr.f32.gmra.mrb[0].mxu0 %v1094
          %v1224 = vpop.f32.mrb[0].mxu0
          %v1225 = vadd.f32 0.0, %v1224
          %v1226 = vpop.f32.mrb[0].mxu0
          %1227 = vmatprep.mubr.f32.mxu0 0.0
          %1228 = vmatmul.mubr.f32.gmra.mrb[0].mxu0 %v1095
          %v1229 = vpop.f32.mrb[0].mxu0
          %v1230 = vadd.f32 0.0, %v1229
          %v1231 = vpop.f32.mrb[0].mxu0
          %1232 = vmatprep.mubr.f32.mxu0 0.0
          %1233 = vmatmul.mubr.f32.gmra.mrb[0].mxu0 %v1096
          %v1234 = vpop.f32.mrb[0].mxu0
          %v1235 = vadd.f32 0.0, %v1234
          %v1236 = vpop.f32.mrb[0].mxu0
          %1237 = vmatprep.mubr.f32.mxu0 0.0
          %1238 = vmatmul.mubr.f32.gmra.mrb[0].mxu0 %v1097
          %v1239 = vpop.f32.mrb[0].mxu0
          %v1240 = vadd.f32 0.0, %v1239
          %v1241 = vpop.f32.mrb[0].mxu0
          %1242 = vdwg.mxu0
          %s1243 = smul.u32 %s210, 16
          %s1244 = scalar_lea.vmem %s177, %s1243 [#allocation2]
          %1245 = vst [vmem:[%s1244] sm:$0xff] %v1165
          %1246 = vst [vmem:[%s1244 + $0x8] sm:$0xff] %v1170
          %1247 = vst [vmem:[%s1244 + $0x10] sm:$0xff] %v1175
          %1248 = vst [vmem:[%s1244 + $0x18] sm:$0xff] %v1180
          %1249 = vst [vmem:[%s1244 + $0x20] sm:$0xff] %v1185
          %1250 = vst [vmem:[%s1244 + $0x28] sm:$0xff] %v1190
          %1251 = vst [vmem:[%s1244 + $0x30] sm:$0xff] %v1195
          %1252 = vst [vmem:[%s1244 + $0x38] sm:$0xff] %v1200
          %1253 = vst [vmem:[%s1244 + $0x40] sm:$0xff] %v1205
          %1254 = vst [vmem:[%s1244 + $0x48] sm:$0xff] %v1210
          %1255 = vst [vmem:[%s1244 + $0x50] sm:$0xff] %v1215
          %1256 = vst [vmem:[%s1244 + $0x58] sm:$0xff] %v1220
          %1257 = vst [vmem:[%s1244 + $0x60] sm:$0xff] %v1225
          %1258 = vst [vmem:[%s1244 + $0x68] sm:$0xff] %v1230
          %1259 = vst [vmem:[%s1244 + $0x70] sm:$0xff] %v1235
          %1260 = vst [vmem:[%s1244 + $0x78] sm:$0xff] %v1240
        $region37: #{tpu_custom_call.1} parent=31 // loop_footer
          %s209 = sadd.s32 1, %s205
        $region38: #{tpu_custom_call.1} parent=31 // loop_footer_branch
          %204 = sbr.rel target = $region34
        $region39: #{tpu_custom_call.1} parent=31 // loop_exit
          _
        %s1261 = sand.u32 %s107, 1
        %s1262 = scalar_lea.sflag [#allocation3], %s1261
        %s1263 = sand.u32 %s107, 1
        %s1264 = smul.addr %s1263, 256
        %s1265 = scalar_lea.vmem [#allocation2], %s1264
        // Predicated region
        $region40: #{tpu_custom_call.1} parent=31 // pred_check
          %p1266 = pneg %p117
        $region41: #{tpu_custom_call.1} parent=31 // pred_check_branch
          %1268 = sbr.rel (%p1266) target = $region43
        $region42: #{tpu_custom_call.1} parent=31 // pred_region
          %s1269 = smul.u32 16, %s22
          %s1271 = ssub.s32 4096, 4096
          %1272 = vsyncadd %s1262, %s1271
          %s1273 = smul.addr %s1269, 2
          %s1274 = smul.addr %s21, 32
          %s1275 = sadd.s32 %s1273, %s1274
          %s1276 = smul.addr %s1275, 128
          %s1277 = scalar_lea.hbm %s3, %s1276
          %s1278 = sshll.u32 %s1265, 4
          %s1279 = int_to_ptr.vmem [resolvable:$true] %s1278
          %1284 = dma.vmem_to_hbm [thread:$0]  %s1279, 4096, %s1277, %s1262, 128, 128, 8
        $region43: #{tpu_custom_call.1} parent=31 // pred_fallthru
          _
      $region32: #{tpu_custom_call.1} parent=5 // pred_fallthru
        _
      %p1285 = scmp.le.s32.totalorder 2, %s12
      // Predicated region
      $region44: #{tpu_custom_call.1} parent=5 // pred_check
        %p1286 = pneg %p1285
      $region45: #{tpu_custom_call.1} parent=5 // pred_check_branch
        %1288 = sbr.rel (%p1286) target = $region47
      $region46: #{tpu_custom_call.1} parent=5 // pred_region
        %s1289 = ssub.s32 %s12, 2
        // Predicated region
        $region48: #{tpu_custom_call.1} parent=46 // pred_check
          %p1290 = pneg %p123
        $region49: #{tpu_custom_call.1} parent=46 // pred_check_branch
          %1292 = sbr.rel (%p1290) target = $region51
        $region50: #{tpu_custom_call.1} parent=46 // pred_region
          %s1293 = sand.u32 %s108, 1
          %s1294 = scalar_lea.sflag [#allocation3], %s1293
          %s1295 = sand.u32 %s108, 1
          %s1296 = smul.addr %s1295, 256
          %s1297 = scalar_lea.vmem [#allocation2], %s1296
          %1298 = dma.done %s1294, 4096
        $region51: #{tpu_custom_call.1} parent=46 // pred_fallthru
          _
      $region47: #{tpu_custom_call.1} parent=5 // pred_fallthru
        _
    $region6: #{tpu_custom_call.1} parent=1 // loop_footer
      %s16 = sadd.s32 1, %s12
    $region7: #{tpu_custom_call.1} parent=1 // loop_footer_branch
      %11 = sbr.rel target = $region3
    $region8: #{tpu_custom_call.1} parent=1 // loop_exit
      _
    %1299 = vsyncpa [#allocation3], 1
    %s1300 = scalar_lea.sflag [#allocation3], 1
    %1301 = vsyncpa %s1300, 1

</llo_original>
